<compile_context>
chip_gen: v5e
topology: v5e:2x2
jax: 0.10.0
libtpu: 0.0.40
codegen_flags: <defaults>
</compile_context>

<pallas_src>
import functools
import math

import jax
import jax.numpy as jnp
from jax.experimental import pallas as pl
from jax.experimental.pallas import tpu as pltpu


def _rup(x, m):
    return (x + m - 1) // m * m


# ---------------------------------------------------------------------------
# Pallas kernel 1: tiled matmul (bf16 operands, f32 acc) with fused bias (+tanh)
# ---------------------------------------------------------------------------
def _mm_kernel(a_ref, b_ref, bias_ref, o_ref, acc_ref, *, act):
    @pl.when(pl.program_id(2) == 0)
    def _():
        acc_ref[...] = jnp.zeros_like(acc_ref)

    acc_ref[...] += jnp.dot(a_ref[...], b_ref[...],
                            preferred_element_type=jnp.float32)

    @pl.when(pl.program_id(2) == pl.num_programs(2) - 1)
    def _():
        r = acc_ref[...] + bias_ref[...]
        if act == "tanh":
            r = jnp.tanh(r)
        o_ref[...] = r.astype(o_ref.dtype)


def _pick_tile_k(Kp):
    """Largest k-tile <= 2048 that divides the 128-rounded K (no K padding waste)."""
    if Kp <= 2048:
        return Kp
    for cand in (2048, 1536, 1024, 768, 512, 384, 256, 128):
        if Kp % cand == 0:
            return cand
    return 128


def matmul_bias_act(a, b, bias, act=None):
    """(M,K) @ (K,N) + bias[N], optional fused tanh.

    Operands are cast to bf16 (f32 accumulation on the MXU, f32 epilogue).
    Tiles are chosen adaptively so small bottleneck layers don't pay 128-tile
    padding, large-K decoder matmuls get tk up to 2048 (few pipeline steps),
    and the grid exposes a parallel axis >= 2 where possible (v7x megacore).
    """
    M, K = a.shape
    K2, N = b.shape
    assert K == K2

    # --- adaptive tiles ----------------------------------------------------
    Mp = _rup(M, 16)                       # bf16 sublane packing: multiple of 16
    tm = Mp if Mp <= 128 else 128
    Mp = _rup(M, tm)

    Kp = _rup(K, 128)
    tk = _pick_tile_k(Kp)

    Np = _rup(N, 128)
    if Np <= 128:
        tn = Np
    elif Mp // tm == 1:
        # single M tile: split N so megacore (v7x) has a parallel axis
        tn = 256 if (Np % 256 == 0 and Np > 256) else 128
    else:
        tn = Np if Np <= 256 else (256 if Np % 256 == 0 else 128)

    # if the grid would be (1,1,k), try to split M for a parallel axis
    if Mp // tm == 1 and Np // tn == 1 and Mp >= 32 and (Mp // 2) % 16 == 0:
        tm = Mp // 2

    # --- operand prep (bf16, pad only if needed) ---------------------------
    a_p = a.astype(jnp.bfloat16)
    if (Mp, Kp) != (M, K):
        a_p = jnp.pad(a_p, ((0, Mp - M), (0, Kp - K)))
    b_p = b.astype(jnp.bfloat16)
    if (Kp, Np) != (K, N):
        b_p = jnp.pad(b_p, ((0, Kp - K), (0, Np - N)))
    bias_p = bias.astype(jnp.float32).reshape(1, N)
    if Np != N:
        bias_p = jnp.pad(bias_p, ((0, 0), (0, Np - N)))

    grid = (Mp // tm, Np // tn, Kp // tk)
    out = pl.pallas_call(
        functools.partial(_mm_kernel, act=act),
        out_shape=jax.ShapeDtypeStruct((Mp, Np), jnp.float32),
        grid_spec=pltpu.PrefetchScalarGridSpec(
            num_scalar_prefetch=0,
            grid=grid,
            in_specs=[
                pl.BlockSpec((tm, tk), lambda i, j, k: (i, k)),
                pl.BlockSpec((tk, tn), lambda i, j, k: (k, j)),
                pl.BlockSpec((1, tn), lambda i, j, k: (0, j)),
            ],
            out_specs=pl.BlockSpec((tm, tn), lambda i, j, k: (i, j)),
            scratch_shapes=[pltpu.VMEM((tm, tn), jnp.float32)],
        ),
        compiler_params=pltpu.CompilerParams(
            dimension_semantics=("parallel", "parallel", "arbitrary")),
    )(a_p, b_p, bias_p)
    if (Mp, Np) != (M, N):
        out = out[:M, :N]
    return out


# ---------------------------------------------------------------------------
# Pallas kernel 2: instance norm (per (n,c) over spatial) + activation
#   - row-tiled (bounds VMEM, pipelines DMA/compute)
#   - mask-free math: padded columns are zero, so sums are exact
# ---------------------------------------------------------------------------
def _inorm_kernel(x_ref, o_ref, *, cols, eps, act, slope):
    x = x_ref[...]
    inv = 1.0 / float(cols)
    mean = jnp.sum(x, axis=1, keepdims=True) * inv
    var = jnp.sum(x * x, axis=1, keepdims=True) * inv - mean * mean
    var = jnp.maximum(var, 0.0)            # guard cancellation (f32 accumulation)
    y = (x - mean) * jax.lax.rsqrt(var + eps)
    if act == "leaky":
        y = jnp.where(y >= 0, y, slope * y)
    elif act == "relu":
        y = jnp.maximum(y, 0.0)
    o_ref[...] = y


def instance_norm_act(x, act, slope=0.2, eps=1e-5):
    N, C, H, W = x.shape
    rows, cols = N * C, H * W
    Rp, Cp = _rup(rows, 8), _rup(cols, 128)
    xf = x.reshape(rows, cols).astype(jnp.float32)
    if (Rp, Cp) != (rows, cols):
        xf = jnp.pad(xf, ((0, Rp - rows), (0, Cp - cols)))
    Rb = math.gcd(Rp, 256)                 # row-tile; keeps full spatial axis in-block
    out = pl.pallas_call(
        functools.partial(_inorm_kernel, cols=cols, eps=eps, act=act, slope=slope),
        out_shape=jax.ShapeDtypeStruct((Rp, Cp), jnp.float32),
        grid=(Rp // Rb,),
        in_specs=[pl.BlockSpec((Rb, Cp), lambda i: (i, 0))],
        out_specs=pl.BlockSpec((Rb, Cp), lambda i: (i, 0)),
        compiler_params=pltpu.CompilerParams(dimension_semantics=("parallel",)),
    )(xf)
    if (Rp, Cp) != (rows, cols):
        out = out[:rows, :cols]
    return out.reshape(N, C, H, W)


# ---------------------------------------------------------------------------
# Conv / transposed-conv glue (im2col in plain JAX, matmul in Pallas)
# ---------------------------------------------------------------------------
def _im2col(x, kh, kw, stride, pad):
    N, C, H, W = x.shape
    xp = jnp.pad(x, ((0, 0), (0, 0), (pad, pad), (pad, pad)))
    Ho = (H + 2 * pad - kh) // stride + 1
    Wo = (W + 2 * pad - kw) // stride + 1
    cols = []
    for i in range(kh):
        for j in range(kw):
            cols.append(xp[:, :, i:i + Ho * stride:stride, j:j + Wo * stride:stride])
    p = jnp.stack(cols, axis=2)                       # (N, C, kh*kw, Ho, Wo)
    p = p.transpose(0, 3, 4, 1, 2).reshape(N * Ho * Wo, C * kh * kw)
    return p, Ho, Wo


def conv2d(x, w, b, stride, pad, act=None):
    """w: (Cout, Cin, kh, kw) like torch.nn.Conv2d."""
    Cout, _, kh, kw = w.shape
    N = x.shape[0]
    cols, Ho, Wo = _im2col(x.astype(jnp.bfloat16), kh, kw, stride, pad)
    wm = w.reshape(Cout, -1).T.astype(jnp.bfloat16)   # (Cin*kh*kw, Cout)
    y = matmul_bias_act(cols, wm, b, act=act)         # (N*Ho*Wo, Cout) f32
    return y.reshape(N, Ho, Wo, Cout).transpose(0, 3, 1, 2)


# sub-pixel decomposition of ConvTranspose2d(k=4, stride=2, pad=1):
# output parity class (ry, rx) is a 2x2 stride-1 conv over the *undilated* input.
# out[2*oy + 0] = X[oy-1]*W[3] + X[oy]  *W[1]      (same in x with rx)
# out[2*oy + 1] = X[oy]  *W[2] + X[oy+1]*W[0]
# All 4 classes share one im2col over X padded by 1 (2x2 window, stride 1); the
# per-class 2x2 sub-kernels are concatenated along the output dim => ONE matmul,
# ~4x fewer FLOPs / im2col bytes than the zero-dilated formulation.
_TAP = ([3, 1], [2, 0])   # _TAP[parity][window_offset] -> original kernel index


def conv_transpose2d(x, w, b):
    """w: (Cin, Cout, 4, 4) like torch.nn.ConvTranspose2d(k=4, s=2, p=1)."""
    Cin, Cout, kh, kw = w.shape
    assert kh == 4 and kw == 4
    N, C, H, W = x.shape
    assert C == Cin

    cols, Hu, Wu = _im2col(x.astype(jnp.bfloat16), 2, 2, stride=1, pad=1)
    assert (Hu, Wu) == (H + 1, W + 1)

    w_cls = []
    for ry in (0, 1):
        for rx in (0, 1):
            sub = w[:, :, _TAP[ry], :][:, :, :, _TAP[rx]]      # (Cin, Cout, 2, 2)
            w_cls.append(sub.transpose(0, 2, 3, 1).reshape(Cin * 4, Cout))
    w_all = jnp.concatenate(w_cls, axis=1)                     # (Cin*4, 4*Cout)
    b_all = jnp.tile(b, 4)

    y = matmul_bias_act(cols, w_all, b_all)                    # (N*(H+1)*(W+1), 4*Cout)
    y = y.reshape(N, H + 1, W + 1, 2, 2, Cout)                 # (n, u, v, ry, rx, co)

    rows = []
    for ry in (0, 1):
        row = [y[:, ry:ry + H, rx:rx + W, ry, rx, :] for rx in (0, 1)]
        rows.append(jnp.stack(row, axis=3))                    # (N, H, W, 2, Cout)
    out = jnp.stack(rows, axis=2)                              # (N, H, 2, W, 2, Cout)
    out = out.reshape(N, 2 * H, 2 * W, Cout).transpose(0, 3, 1, 2)
    return out


# ---------------------------------------------------------------------------
# Blocks
# ---------------------------------------------------------------------------
# TODO(synk): for layers whose whole M fits one tile (e3/e4/b1/b2, small deconvs),
#             the instance-norm + activation could be fused into the matmul
#             epilogue to save one pallas_call + an HBM round trip per block.
def conv_block(x, p, stride):
    y = conv2d(x, p["w"], p["b"], stride=stride, pad=1)
    return instance_norm_act(y, act="leaky", slope=0.2)


def deconv_block(x, p):
    y = conv_transpose2d(x, p["w"], p["b"])
    return instance_norm_act(y, act="relu")


def attention_block(x, p):
    """SAGAN self-attention.  q/k/v projections are ONE batched Pallas matmul;
    the tiny (HW x HW) energy/softmax/out core stays in plain jnp (HW=4 at the
    bottleneck — padding it to MXU tiles would cost far more than it saves)."""
    B, C, H, W = x.shape
    HW = H * W
    C8 = C // 8
    x2 = x.transpose(0, 2, 3, 1).reshape(B * HW, C)
    wq = p["wq"].reshape(C8, C)
    wk = p["wk"].reshape(C8, C)
    wv = p["wv"].reshape(C, C)
    w_all = jnp.concatenate([wq.T, wk.T, wv.T], axis=1)        # (C, 2*C8 + C)
    b_all = jnp.concatenate([p["bq"], p["bk"], p["bv"]])
    qkv = matmul_bias_act(x2, w_all, b_all)                    # (B*HW, 2*C8+C) f32

    q3 = qkv[:, :C8].reshape(B, HW, C8)
    k3 = qkv[:, C8:2 * C8].reshape(B, HW, C8)
    v3 = qkv[:, 2 * C8:].reshape(B, HW, C)

    energy = jnp.einsum('bic,bjc->bij', q3, k3)                # (B, HW, HW)
    attn = jax.nn.softmax(energy, axis=-1)
    o3 = jnp.einsum('bij,bjc->bic', attn, v3)                  # (B, HW, C)
    out = o3.reshape(B, H, W, C).transpose(0, 3, 1, 2)
    return p["gamma"] * out + x


# ---------------------------------------------------------------------------
# Generator forward
# ---------------------------------------------------------------------------
def generator_forward(params, x, mask):
    x = jnp.concatenate([x, mask], axis=1)            # (B, 4, H, W)
    e1 = conv_block(x, params["e1"], stride=2)
    e2 = conv_block(e1, params["e2"], stride=2)
    e3 = conv_block(e2, params["e3"], stride=2)
    e4 = conv_block(e3, params["e4"], stride=2)
    b = conv_block(e4, params["b1"], stride=1)
    b = attention_block(b, params["attn"])
    b = conv_block(b, params["b2"], stride=1)
    d4 = deconv_block(jnp.concatenate([b, e4], axis=1), params["d4"])
    d3 = deconv_block(jnp.concatenate([d4, e3], axis=1), params["d3"])
    d2 = deconv_block(jnp.concatenate([d3, e2], axis=1), params["d2"])
    d1 = deconv_block(jnp.concatenate([d2, e1], axis=1), params["d1"])
    out = conv2d(d1, params["out"]["w"], params["out"]["b"],
                 stride=1, pad=1, act="tanh")          # fused tanh in matmul kernel
    return out


# ---------------------------------------------------------------------------
# Deterministic parameter init
# ---------------------------------------------------------------------------
def init_params(key):
    keys = list(jax.random.split(key, 20))
    it = iter(keys)

    def conv_p(cout, cin, k):
        k1, k2 = jax.random.split(next(it))
        fan = cin * k * k
        return {"w": jax.random.normal(k1, (cout, cin, k, k), jnp.float32)
                      / jnp.sqrt(float(fan)),
                "b": 0.01 * jax.random.normal(k2, (cout,), jnp.float32)}

    def deconv_p(cin, cout, k=4):
        k1, k2 = jax.random.split(next(it))
        fan = cin * k * k
        return {"w": jax.random.normal(k1, (cin, cout, k, k), jnp.float32)
                      / jnp.sqrt(float(fan)),
                "b": 0.01 * jax.random.normal(k2, (cout,), jnp.float32)}

    C = 512
    qp, kp_, vp = conv_p(C // 8, C, 1), conv_p(C // 8, C, 1), conv_p(C, C, 1)
    params = {
        "e1": conv_p(64, 4, 3),
        "e2": conv_p(128, 64, 3),
        "e3": conv_p(256, 128, 3),
        "e4": conv_p(512, 256, 3),
        "b1": conv_p(512, 512, 3),
        "b2": conv_p(512, 512, 3),
        "attn": {"wq": qp["w"], "bq": qp["b"],
                 "wk": kp_["w"], "bk": kp_["b"],
                 "wv": vp["w"], "bv": vp["b"],
                 "gamma": jnp.float32(0.1)},
        "d4": deconv_p(1024, 256),
        "d3": deconv_p(512, 128),
        "d2": deconv_p(256, 64),
        "d1": deconv_p(128, 32),
        "out": conv_p(3, 32, 3),
    }
    return params


if __name__ == "__main__":
    key = jax.random.PRNGKey(0)
    kp, kx, km = jax.random.split(key, 3)
    params = init_params(kp)

    B, H, W = 2, 32, 32
    x = jax.random.normal(kx, (B, 3, H, W), jnp.float32)
    mask = (jax.random.uniform(km, (B, 1, H, W)) > 0.5).astype(jnp.float32)

    out = generator_forward(params, x, mask)
    out = jax.block_until_ready(out)

    assert out.shape == (B, 3, H, W), out.shape
    assert bool(jnp.all(jnp.isfinite(out)))
    assert bool(jnp.all(jnp.abs(out) <= 1.0))  # tanh range
    print("KERNEL_OK")
</pallas_src>

<mosaic_0001>
module attributes {stable_mosaic.version = 11 : i64} {
  func.func @_mm_kernel(%arg0: i32, %arg1: i32, %arg2: i32, %arg3: memref<128x128xbf16, #tpu.memory_space<vmem>>, %arg4: memref<128x128xbf16, #tpu.memory_space<vmem>>, %arg5: memref<1x128xf32, #tpu.memory_space<vmem>>, %arg6: memref<128x128xf32, #tpu.memory_space<vmem>>, %arg7: memref<128x128xf32, #tpu.memory_space<vmem>>) attributes {dimension_semantics = [#tpu.dimension_semantics<parallel>, #tpu.dimension_semantics<parallel>, #tpu.dimension_semantics<arbitrary>], iteration_bounds = array<i64: 4, 1, 1>, scalar_prefetch = 0 : i64, scratch_operands = 1 : i64, tpu.core_type = #tpu.core_type<tc>, window_params = [{transform_indices = @transform_0, window_bounds = array<i64: 128, 128>}, {transform_indices = @transform_1, window_bounds = array<i64: 128, 128>}, {transform_indices = @transform_2, window_bounds = array<i64: 1, 128>}, {transform_indices = @transform_3, window_bounds = array<i64: 128, 128>}]} {
    %c0_i32 = arith.constant 0 : i32
    %0 = arith.cmpi eq, %arg2, %c0_i32 : i32
    %1 = arith.extui %0 : i1 to i32
    %c0_i32_0 = arith.constant 0 : i32
    %2 = arith.cmpi ne, %1, %c0_i32_0 : i32
    scf.if %2 {
      %cst_10 = arith.constant 0.000000e+00 : f32
      %12 = vector.broadcast %cst_10 : f32 to vector<128x128xf32>
      %c0_11 = arith.constant 0 : index
      %c0_12 = arith.constant 0 : index
      %13 = vector.load %arg7[%c0_11, %c0_12] : memref<128x128xf32, #tpu.memory_space<vmem>>, vector<128x128xf32>
      tpu.vector_store %arg7[%c0_11, %c0_12], %12 {strides = array<i32>} : memref<128x128xf32, #tpu.memory_space<vmem>>, vector<128x128xf32>,
    } else {
    }
    %c0 = arith.constant 0 : index
    %c0_1 = arith.constant 0 : index
    %3 = vector.load %arg7[%c0, %c0_1] : memref<128x128xf32, #tpu.memory_space<vmem>>, vector<128x128xf32>
    %c0_2 = arith.constant 0 : index
    %c0_3 = arith.constant 0 : index
    %4 = vector.load %arg3[%c0_2, %c0_3] : memref<128x128xbf16, #tpu.memory_space<vmem>>, vector<128x128xbf16>
    %c0_4 = arith.constant 0 : index
    %c0_5 = arith.constant 0 : index
    %5 = vector.load %arg4[%c0_4, %c0_5] : memref<128x128xbf16, #tpu.memory_space<vmem>>, vector<128x128xbf16>
    %cst = arith.constant dense<0.000000e+00> : vector<128x128xf32>
    %6 = tpu.matmul %4, %5, %cst {dimension_numbers = #tpu.dot_dimension_numbers<[1], [0], [0], [1], [0, 0, 1, 1], [], []>} : vector<128x128xbf16>, vector<128x128xbf16>, vector<128x128xf32> -> vector<128x128xf32>
    %7 = arith.addf %3, %6 : vector<128x128xf32>
    %c0_6 = arith.constant 0 : index
    %c0_7 = arith.constant 0 : index
    %8 = vector.load %arg7[%c0_6, %c0_7] : memref<128x128xf32, #tpu.memory_space<vmem>>, vector<128x128xf32>
    tpu.vector_store %arg7[%c0_6, %c0_7], %7 {strides = array<i32>} : memref<128x128xf32, #tpu.memory_space<vmem>>, vector<128x128xf32>,
    %c0_i32_8 = arith.constant 0 : i32
    %9 = arith.cmpi eq, %arg2, %c0_i32_8 : i32
    %10 = arith.extui %9 : i1 to i32
    %c0_i32_9 = arith.constant 0 : i32
    %11 = arith.cmpi ne, %10, %c0_i32_9 : i32
    scf.if %11 {
      %c0_10 = arith.constant 0 : index
      %c0_11 = arith.constant 0 : index
      %12 = vector.load %arg7[%c0_10, %c0_11] : memref<128x128xf32, #tpu.memory_space<vmem>>, vector<128x128xf32>
      %c0_12 = arith.constant 0 : index
      %c0_13 = arith.constant 0 : index
      %13 = vector.load %arg5[%c0_12, %c0_13] : memref<1x128xf32, #tpu.memory_space<vmem>>, vector<1x128xf32>
      %14 = vector.broadcast %13 : vector<1x128xf32> to vector<128x128xf32>
      %15 = arith.addf %12, %14 : vector<128x128xf32>
      %c0_14 = arith.constant 0 : index
      %c0_15 = arith.constant 0 : index
      %16 = vector.load %arg6[%c0_14, %c0_15] : memref<128x128xf32, #tpu.memory_space<vmem>>, vector<128x128xf32>
      tpu.vector_store %arg6[%c0_14, %c0_15], %15 {strides = array<i32>} : memref<128x128xf32, #tpu.memory_space<vmem>>, vector<128x128xf32>,
    } else {
    }
    return
  }
  func.func @transform_0(%arg0: i32, %arg1: i32, %arg2: i32) -> (i32, i32) {
    %c0_i32 = arith.constant 0 : i32
    return %arg0, %arg2 : i32, i32
  }
  func.func @transform_1(%arg0: i32, %arg1: i32, %arg2: i32) -> (i32, i32) {
    %c0_i32 = arith.constant 0 : i32
    return %arg2, %arg1 : i32, i32
  }
  func.func @transform_2(%arg0: i32, %arg1: i32, %arg2: i32) -> (i32, i32) {
    %c0_i32 = arith.constant 0 : i32
    %c0_i32_0 = arith.constant 0 : i32
    return %c0_i32, %arg1 : i32, i32
  }
  func.func @transform_3(%arg0: i32, %arg1: i32, %arg2: i32) -> (i32, i32) {
    %c0_i32 = arith.constant 0 : i32
    return %arg0, %arg1 : i32, i32
  }
}

</mosaic_0001>

<llo_original>
// kernel: tpu_custom_call.1
$region0: #{tpu_custom_call.1}
  #allocation0 [shape = 'u32[]', space=smem, size = 0x4, offset = 0x4, fixed_abs, tag = 'smem constant byte address 0x4 - core index']
  #allocation1 [shape = 'u32[72,128]{1,0:T(1,128)}', space=vmem, size = 0x9000, scoped, tag = 'internal scratch']
  #allocation2 [shape = 'f32[128,128]{1,0:T(8,128)}', space=vmem, size = 0x10000, scoped, tag = 'scratch operand']
  %s0 = inlined_call_operand.hbm [shape: bf16[512,128], index: 0, kind: input, shape index: {}]
  %s1 = inlined_call_operand.hbm [shape: bf16[128,128], index: 1, kind: input, shape index: {}]
  %s2 = inlined_call_operand.vmem [shape: f32[1,128], index: 2, kind: input, shape index: {}]
  %s3 = inlined_call_operand.hbm [shape: f32[512,128], index: 3, kind: output, shape index: {}]
  %s4 = sld [smem:[#allocation0]]
  $region61: #{tpu_custom_call.1} parent=0
    _
  %s6 = ssub.s32 1, %s4
  %s7 = scalar_select 0, %s6, %s4
  $region1: #{tpu_custom_call.1} parent=0
    #allocation3 [shape = 'u8[65536]{0}', space=vmem, size = 0x10000, scoped, tag = 'input window, operand 0']
    #allocation4 [shape = 's32[2]{0}', space=sflag, size = 0x8, scoped, tag = 'scoped memory for tpu_custom_call.1']
    #allocation5 [shape = 's32[2]{0}', space=sflag, size = 0x8, scoped, tag = 'scoped memory for tpu_custom_call.1']
    #allocation6 [shape = 'u8[32768]{0}', space=vmem, size = 0x8000, scoped, tag = 'input window, operand 1, single buffered']
    #allocation7 [shape = 's32[1]{0}', space=sflag, size = 0x4, scoped, tag = 'scoped memory for tpu_custom_call.1']
    #allocation8 [shape = 'u8[131072]{0}', space=vmem, size = 0x20000, scoped, tag = 'output window, operand 0']
    %8 = vsyncpa [#allocation4], 0
    %s9 = scalar_lea.sflag [#allocation4], 1
    %10 = vsyncpa %s9, 0
    %11 = vsyncpa [#allocation7], 0
    %12 = vsyncpa [#allocation5], 0
    %s13 = scalar_lea.sflag [#allocation5], 1
    %14 = vsyncpa %s13, 0
    loop: start=0, step=1, limit=6
    $region2: #{tpu_custom_call.1} parent=1 // loop_pre_header
      _
    $region3: #{tpu_custom_call.1} parent=1 // loop_header
      %s16 = sphi 0, %s20
      %p17 = scmp.ge.s32.totalorder %s16, 6
      %s23 = sphi 0, %s42
      %s24 = sphi 0, %s38
      %s25 = sphi 0, %s34
      %s26 = sphi 0, %s23
      %s27 = sphi 0, %s24
      %s28 = sphi 0, %s25
      %s29 = sphi 0, %s26
      %s30 = sphi 0, %s27
      %s31 = sphi 0, %s28
      %s47 = sphi 0, %s49
      %s50 = sphi 0, %s47
      %s51 = sphi 0, %s50
      %s67 = sphi 0, %s51
      %s75 = sphi 0, %s77
      %s78 = sphi 0, %s75
      %s79 = sphi 0, %s78
      %s95 = sphi 0, %s79
      %s101 = sphi 0, %s103
      %s104 = sphi 0, %s101
      %s105 = sphi 0, %s104
      %s121 = sphi 0, %s105
      %s129 = sphi 0, %s131
      %s132 = sphi 0, %s129
      %s133 = sphi 0, %s132
      %s149 = sphi 0, %s133
    $region4: #{tpu_custom_call.1} parent=1 // loop_header_branch
      %19 = sbr.rel (%p17) target = $region8
    $region5: #{tpu_custom_call.1} parent=1 // loop_body
      %s21 = ssub.s32 %s16, 1
      %s22 = ssub.s32 %s16, 2
      %s32 = sadd.s32 1, %s25
      %p33 = scmp.ge.s32.totalorder %s32, 1
      %s34 = scalar_select %p33, 0, %s32
      %s35 = sadd.s32 1, %s24
      %s36 = scalar_select %p33, %s35, %s24
      %p37 = scmp.ge.s32.totalorder %s36, 1
      %s38 = scalar_select %p37, 0, %s36
      %s39 = sadd.s32 1, %s23
      %s40 = scalar_select %p37, %s39, %s23
      %p41 = scmp.ge.s32.totalorder %s40, 4
      %s42 = scalar_select %p41, 0, %s40
      %s43 = ssub.s32 %s23, %s42
      %s44 = ssub.s32 %s25, %s34
      %s45 = sor.u32 %s43, %s44
      %p46 = scmp.eq.s32.totalorder %s45, 0
      %s48 = sadd.s32 %s47, 1
      %s49 = scalar_select %p46, %s47, %s48
      %p52 = pneg %p46
      %p53 = scmp.eq.s32.totalorder %s16, 3
      %p54 = por %p52, %p53
      %p55 = scmp.ne.s32.totalorder %s47, %s50
      %p56 = scmp.eq.s32.totalorder %s16, 0
      %p57 = por %p55, %p56
      %p58 = scmp.ne.s32.totalorder %s47, %s50
      %p59 = scmp.eq.s32.totalorder %s21, 3
      %p60 = por %p58, %p59
      %p61 = scmp.ne.s32.totalorder %s50, %s51
      %p62 = scmp.eq.s32.totalorder %s21, 0
      %p63 = por %p61, %p62
      %p64 = scmp.ne.s32.totalorder %s50, %s51
      %p65 = scmp.eq.s32.totalorder %s22, 3
      %p66 = por %p64, %p65
      %p68 = scmp.ne.s32.totalorder %s51, %s67
      %p69 = scmp.eq.s32.totalorder %s22, 0
      %p70 = por %p68, %p69
      %s71 = ssub.s32 %s25, %s34
      %s72 = ssub.s32 %s24, %s38
      %s73 = sor.u32 %s71, %s72
      %p74 = scmp.eq.s32.totalorder %s73, 0
      %s76 = sadd.s32 %s75, 1
      %s77 = scalar_select %p74, %s75, %s76
      %p80 = pneg %p74
      %p81 = scmp.eq.s32.totalorder %s16, 3
      %p82 = por %p80, %p81
      %p83 = scmp.ne.s32.totalorder %s75, %s78
      %p84 = scmp.eq.s32.totalorder %s16, 0
      %p85 = por %p83, %p84
      %p86 = scmp.ne.s32.totalorder %s75, %s78
      %p87 = scmp.eq.s32.totalorder %s21, 3
      %p88 = por %p86, %p87
      %p89 = scmp.ne.s32.totalorder %s78, %s79
      %p90 = scmp.eq.s32.totalorder %s21, 0
      %p91 = por %p89, %p90
      %p92 = scmp.ne.s32.totalorder %s78, %s79
      %p93 = scmp.eq.s32.totalorder %s22, 3
      %p94 = por %p92, %p93
      %p96 = scmp.ne.s32.totalorder %s79, %s95
      %p97 = scmp.eq.s32.totalorder %s22, 0
      %p98 = por %p96, %p97
      %s99 = ssub.s32 %s24, %s38
      %p100 = scmp.eq.s32.totalorder %s99, 0
      %s102 = sadd.s32 %s101, 1
      %s103 = scalar_select %p100, %s101, %s102
      %p106 = pneg %p100
      %p107 = scmp.eq.s32.totalorder %s16, 3
      %p108 = por %p106, %p107
      %p109 = scmp.ne.s32.totalorder %s101, %s104
      %p110 = scmp.eq.s32.totalorder %s16, 0
      %p111 = por %p109, %p110
      %p112 = scmp.ne.s32.totalorder %s101, %s104
      %p113 = scmp.eq.s32.totalorder %s21, 3
      %p114 = por %p112, %p113
      %p115 = scmp.ne.s32.totalorder %s104, %s105
      %p116 = scmp.eq.s32.totalorder %s21, 0
      %p117 = por %p115, %p116
      %p118 = scmp.ne.s32.totalorder %s104, %s105
      %p119 = scmp.eq.s32.totalorder %s22, 3
      %p120 = por %p118, %p119
      %p122 = scmp.ne.s32.totalorder %s105, %s121
      %p123 = scmp.eq.s32.totalorder %s22, 0
      %p124 = por %p122, %p123
      %s125 = ssub.s32 %s23, %s42
      %s126 = ssub.s32 %s24, %s38
      %s127 = sor.u32 %s125, %s126
      %p128 = scmp.eq.s32.totalorder %s127, 0
      %s130 = sadd.s32 %s129, 1
      %s131 = scalar_select %p128, %s129, %s130
      %p134 = pneg %p128
      %p135 = scmp.eq.s32.totalorder %s16, 3
      %p136 = por %p134, %p135
      %p137 = scmp.ne.s32.totalorder %s129, %s132
      %p138 = scmp.eq.s32.totalorder %s16, 0
      %p139 = por %p137, %p138
      %p140 = scmp.ne.s32.totalorder %s129, %s132
      %p141 = scmp.eq.s32.totalorder %s21, 3
      %p142 = por %p140, %p141
      %p143 = scmp.ne.s32.totalorder %s132, %s133
      %p144 = scmp.eq.s32.totalorder %s21, 0
      %p145 = por %p143, %p144
      %p146 = scmp.ne.s32.totalorder %s132, %s133
      %p147 = scmp.eq.s32.totalorder %s22, 3
      %p148 = por %p146, %p147
      %p150 = scmp.ne.s32.totalorder %s133, %s149
      %p151 = scmp.eq.s32.totalorder %s22, 0
      %p152 = por %p150, %p151
      %p153 = scmp.le.s32.totalorder 1, %s16
      %p154 = scmp.lt.s32.totalorder %s16, 5
      %p155 = pnand %p153, %p154
      %p156 = pneg %p155
      // Predicated region
      $region9: #{tpu_custom_call.1} parent=5 // pred_check
        _
      $region10: #{tpu_custom_call.1} parent=5 // pred_check_branch
        %158 = sbr.rel (%p155) target = $region12
      $region11: #{tpu_custom_call.1} parent=5 // pred_region
        %s159 = ssub.s32 %s16, 1
        // Predicated region
        $region13: #{tpu_custom_call.1} parent=11 // pred_check
          %p160 = pneg %p91
        $region14: #{tpu_custom_call.1} parent=11 // pred_check_branch
          %162 = sbr.rel (%p160) target = $region16
        $region15: #{tpu_custom_call.1} parent=11 // pred_region
          %s163 = smul.u32 16, %s28
          %165 = vsyncadd [#allocation7], 0
          %s166 = sadd.s32 %s27, %s163
          %s167 = smul.addr %s166, 4
          %s168 = scalar_lea.hbm %s1, %s167
          %s169 = sshll.u32 %s168, 4
          %s170 = int_to_ptr.hbm [resolvable:$true] %s169
          %s171 = sshll.u32 [#allocation6], 4
          %s172 = int_to_ptr.vmem [resolvable:$true] %s171
          %177 = dma.hbm_to_vmem [thread:$0]  %s170, 1024, %s172, [#allocation7], 64, 64, 4
        $region16: #{tpu_custom_call.1} parent=11 // pred_fallthru
          _
        // Predicated region
        $region17: #{tpu_custom_call.1} parent=11 // pred_check
          %p178 = pneg %p117
        $region18: #{tpu_custom_call.1} parent=11 // pred_check_branch
          %180 = sbr.rel (%p178) target = $region20
        $region19: #{tpu_custom_call.1} parent=11 // pred_region
          %p181 = scmp.lt.s32.totalorder %s27, 0
          %s182 = scalar_select %p181, %s27, 0
          %s183 = scalar_lea.vmem %s2, %s182
        $region20: #{tpu_custom_call.1} parent=11 // pred_fallthru
          _
      $region12: #{tpu_custom_call.1} parent=5 // pred_fallthru
        _
      %p184 = scmp.lt.s32.totalorder %s16, 4
      // Predicated region
      $region21: #{tpu_custom_call.1} parent=5 // pred_check
        %p185 = pneg %p184
      $region22: #{tpu_custom_call.1} parent=5 // pred_check_branch
        %187 = sbr.rel (%p185) target = $region24
      $region23: #{tpu_custom_call.1} parent=5 // pred_region
        // Predicated region
        $region25: #{tpu_custom_call.1} parent=23 // pred_check
          %p188 = pneg %p57
        $region26: #{tpu_custom_call.1} parent=23 // pred_check_branch
          %190 = sbr.rel (%p188) target = $region28
        $region27: #{tpu_custom_call.1} parent=23 // pred_region
          %s191 = sand.u32 %s47, 1
          %s192 = scalar_lea.sflag [#allocation4], %s191
          %s193 = sand.u32 %s47, 1
          %s194 = smul.addr %s193, 64
          %s195 = scalar_lea.vmem [#allocation3], %s194
          %s196 = smul.u32 16, %s23
          %198 = vsyncadd %s192, 0
          %s199 = sadd.s32 %s25, %s196
          %s200 = smul.addr %s199, 4
          %s201 = scalar_lea.hbm %s0, %s200
          %s202 = sshll.u32 %s201, 4
          %s203 = int_to_ptr.hbm [resolvable:$true] %s202
          %s204 = sshll.u32 %s195, 4
          %s205 = int_to_ptr.vmem [resolvable:$true] %s204
          %210 = dma.hbm_to_vmem [thread:$0]  %s203, 1024, %s205, %s192, 64, 64, 4
        $region28: #{tpu_custom_call.1} parent=23 // pred_fallthru
          _
      $region24: #{tpu_custom_call.1} parent=5 // pred_fallthru
        _
      %p211 = scmp.le.s32.totalorder 1, %s16
      %p212 = scmp.lt.s32.totalorder %s16, 5
      %p213 = pnand %p211, %p212
      %p214 = pneg %p213
      // Predicated region
      $region29: #{tpu_custom_call.1} parent=5 // pred_check
        _
      $region30: #{tpu_custom_call.1} parent=5 // pred_check_branch
        %216 = sbr.rel (%p213) target = $region32
      $region31: #{tpu_custom_call.1} parent=5 // pred_region
        %s217 = ssub.s32 %s16, 1
        %s218 = sand.u32 %s50, 1
        %s219 = scalar_lea.sflag [#allocation4], %s218
        %s220 = sand.u32 %s50, 1
        %s221 = smul.addr %s220, 64
        %s222 = scalar_lea.vmem [#allocation3], %s221
        // Predicated region
        $region33: #{tpu_custom_call.1} parent=31 // pred_check
          %p223 = pneg %p63
        $region34: #{tpu_custom_call.1} parent=31 // pred_check_branch
          %225 = sbr.rel (%p223) target = $region36
        $region35: #{tpu_custom_call.1} parent=31 // pred_region
          %227 = dma.done %s219, 1024
        $region36: #{tpu_custom_call.1} parent=31 // pred_fallthru
          _
        // Predicated region
        $region37: #{tpu_custom_call.1} parent=31 // pred_check
          %p228 = pneg %p91
        $region38: #{tpu_custom_call.1} parent=31 // pred_check_branch
          %230 = sbr.rel (%p228) target = $region40
        $region39: #{tpu_custom_call.1} parent=31 // pred_region
          %232 = dma.done [#allocation7], 1024
        $region40: #{tpu_custom_call.1} parent=31 // pred_fallthru
          _
        %s233 = sand.u32 %s50, 1
        %s234 = scalar_lea.sflag [#allocation4], %s233
        %s235 = sand.u32 %s50, 1
        %s236 = smul.addr %s235, 64
        %s237 = scalar_lea.vmem [#allocation3], %s236
        %p238 = pneg %p63
        %p239 = pneg %p60
        %p240 = pneg %p91
        %p241 = pneg %p88
        %p242 = scmp.lt.s32.totalorder %s27, 0
        %s243 = scalar_select %p242, %s27, 0
        %s244 = scalar_lea.vmem %s2, %s243
        %p245 = pneg %p117
        %p246 = pneg %p114
        %p247 = pneg %p145
        %p248 = pneg %p142
        %s249 = sand.u32 %s132, 1
        %s250 = scalar_lea.sflag [#allocation5], %s249
        %s251 = sand.u32 %s132, 1
        %s252 = smul.addr %s251, 128
        %s253 = scalar_lea.vmem [#allocation8], %s252
        %s254 = smul.u32 16, %s26
        %s255 = smul.u32 16, %s28
        %p256 = scmp.lt.s32.totalorder %s27, 0
        %s257 = scalar_select %p256, %s27, 0
        %s258 = scalar_lea.vmem %s2, %s257
        %s259 = smul.u32 16, %s26
        %p260 = scmp.eq.s32.totalorder %s28, 0
        // Predicated region
        $region41: #{tpu_custom_call.1} parent=31 // pred_check
          %p261 = pneg %p260
        $region42: #{tpu_custom_call.1} parent=31 // pred_check_branch
          %263 = sbr.rel (%p261) target = $region44
        $region43: #{tpu_custom_call.1} parent=31 // pred_region
          %264 = vst [vmem:[#allocation2] sm:$0xff] 0.0
          %265 = vst [vmem:[#allocation2 + $0x8] sm:$0xff] 0.0
          %266 = vst [vmem:[#allocation2 + $0x10] sm:$0xff] 0.0
          %267 = vst [vmem:[#allocation2 + $0x18] sm:$0xff] 0.0
          %268 = vst [vmem:[#allocation2 + $0x20] sm:$0xff] 0.0
          %269 = vst [vmem:[#allocation2 + $0x28] sm:$0xff] 0.0
          %270 = vst [vmem:[#allocation2 + $0x30] sm:$0xff] 0.0
          %271 = vst [vmem:[#allocation2 + $0x38] sm:$0xff] 0.0
          %272 = vst [vmem:[#allocation2 + $0x40] sm:$0xff] 0.0
          %273 = vst [vmem:[#allocation2 + $0x48] sm:$0xff] 0.0
          %274 = vst [vmem:[#allocation2 + $0x50] sm:$0xff] 0.0
          %275 = vst [vmem:[#allocation2 + $0x58] sm:$0xff] 0.0
          %276 = vst [vmem:[#allocation2 + $0x60] sm:$0xff] 0.0
          %277 = vst [vmem:[#allocation2 + $0x68] sm:$0xff] 0.0
          %278 = vst [vmem:[#allocation2 + $0x70] sm:$0xff] 0.0
          %279 = vst [vmem:[#allocation2 + $0x78] sm:$0xff] 0.0
        $region44: #{tpu_custom_call.1} parent=31 // pred_fallthru
          _
        %v280 = vld [vmem:[#allocation2] sm:$0xff]
        %v281 = vld [vmem:[#allocation2 + $0x8] sm:$0xff]
        %v282 = vld [vmem:[#allocation2 + $0x10] sm:$0xff]
        %v283 = vld [vmem:[#allocation2 + $0x18] sm:$0xff]
        %v284 = vld [vmem:[#allocation2 + $0x20] sm:$0xff]
        %v285 = vld [vmem:[#allocation2 + $0x28] sm:$0xff]
        %v286 = vld [vmem:[#allocation2 + $0x30] sm:$0xff]
        %v287 = vld [vmem:[#allocation2 + $0x38] sm:$0xff]
        %v288 = vld [vmem:[#allocation2 + $0x40] sm:$0xff]
        %v289 = vld [vmem:[#allocation2 + $0x48] sm:$0xff]
        %v290 = vld [vmem:[#allocation2 + $0x50] sm:$0xff]
        %v291 = vld [vmem:[#allocation2 + $0x58] sm:$0xff]
        %v292 = vld [vmem:[#allocation2 + $0x60] sm:$0xff]
        %v293 = vld [vmem:[#allocation2 + $0x68] sm:$0xff]
        %v294 = vld [vmem:[#allocation2 + $0x70] sm:$0xff]
        %v295 = vld [vmem:[#allocation2 + $0x78] sm:$0xff]
        %v296 = vld [vmem:[%s222] sm:$0xf]
        %v297 = vld [vmem:[%s222 + $0x4] sm:$0xf]
        %v298 = vld [vmem:[%s222 + $0x8] sm:$0xf]
        %v299 = vld [vmem:[%s222 + $0xc] sm:$0xf]
        %v300 = vld [vmem:[%s222 + $0x10] sm:$0xf]
        %v301 = vld [vmem:[%s222 + $0x14] sm:$0xf]
        %v302 = vld [vmem:[%s222 + $0x18] sm:$0xf]
        %v303 = vld [vmem:[%s222 + $0x1c] sm:$0xf]
        %v304 = vld [vmem:[%s222 + $0x20] sm:$0xf]
        %v305 = vld [vmem:[%s222 + $0x24] sm:$0xf]
        %v306 = vld [vmem:[%s222 + $0x28] sm:$0xf]
        %v307 = vld [vmem:[%s222 + $0x2c] sm:$0xf]
        %v308 = vld [vmem:[%s222 + $0x30] sm:$0xf]
        %v309 = vld [vmem:[%s222 + $0x34] sm:$0xf]
        %v310 = vld [vmem:[%s222 + $0x38] sm:$0xf]
        %v311 = vld [vmem:[%s222 + $0x3c] sm:$0xf]
        %v312 = vld [vmem:[#allocation6] sm:$0xf]
        %v313 = vld [vmem:[#allocation6 + $0x4] sm:$0xf]
        %v314 = vld [vmem:[#allocation6 + $0x8] sm:$0xf]
        %v315 = vld [vmem:[#allocation6 + $0xc] sm:$0xf]
        %v316 = vld [vmem:[#allocation6 + $0x10] sm:$0xf]
        %v317 = vld [vmem:[#allocation6 + $0x14] sm:$0xf]
        %v318 = vld [vmem:[#allocation6 + $0x18] sm:$0xf]
        %v319 = vld [vmem:[#allocation6 + $0x1c] sm:$0xf]
        %v320 = vld [vmem:[#allocation6 + $0x20] sm:$0xf]
        %v321 = vld [vmem:[#allocation6 + $0x24] sm:$0xf]
        %v322 = vld [vmem:[#allocation6 + $0x28] sm:$0xf]
        %v323 = vld [vmem:[#allocation6 + $0x2c] sm:$0xf]
        %v324 = vld [vmem:[#allocation6 + $0x30] sm:$0xf]
        %v325 = vld [vmem:[#allocation6 + $0x34] sm:$0xf]
        %v326 = vld [vmem:[#allocation6 + $0x38] sm:$0xf]
        %v327 = vld [vmem:[#allocation6 + $0x3c] sm:$0xf]
        %v344 = vunpack.c.l.b16 %v296
        %v345 = vunpack.c.l.b16 %v297
        %v346 = vunpack.c.l.b16 %v298
        %v347 = vunpack.c.l.b16 %v299
        %v348 = vunpack.c.l.b16 %v300
        %v349 = vunpack.c.l.b16 %v301
        %v350 = vunpack.c.l.b16 %v302
        %v351 = vunpack.c.l.b16 %v303
        %v352 = vunpack.c.l.b16 %v304
        %v353 = vunpack.c.l.b16 %v305
        %v354 = vunpack.c.l.b16 %v306
        %v355 = vunpack.c.l.b16 %v307
        %v356 = vunpack.c.l.b16 %v308
        %v357 = vunpack.c.l.b16 %v309
        %v358 = vunpack.c.l.b16 %v310
        %v359 = vunpack.c.l.b16 %v311
        %v360 = vpack.c.b16 %v345, %v344
        %v361 = vpack.c.b16 %v347, %v346
        %v362 = vpack.c.b16 %v349, %v348
        %v363 = vpack.c.b16 %v351, %v350
        %v364 = vpack.c.b16 %v353, %v352
        %v365 = vpack.c.b16 %v355, %v354
        %v366 = vpack.c.b16 %v357, %v356
        %v367 = vpack.c.b16 %v359, %v358
        %v392 = vunpack.c.l.b16 %v312
        %v393 = vunpack.c.l.b16 %v313
        %v394 = vunpack.c.l.b16 %v314
        %v395 = vunpack.c.l.b16 %v315
        %v396 = vunpack.c.l.b16 %v316
        %v397 = vunpack.c.l.b16 %v317
        %v398 = vunpack.c.l.b16 %v318
        %v399 = vunpack.c.l.b16 %v319
        %v400 = vunpack.c.l.b16 %v320
        %v401 = vunpack.c.l.b16 %v321
        %v402 = vunpack.c.l.b16 %v322
        %v403 = vunpack.c.l.b16 %v323
        %v404 = vunpack.c.l.b16 %v324
        %v405 = vunpack.c.l.b16 %v325
        %v406 = vunpack.c.l.b16 %v326
        %v407 = vunpack.c.l.b16 %v327
        %v408 = vpack.c.b16 %v393, %v392
        %v409 = vpack.c.b16 %v395, %v394
        %v410 = vpack.c.b16 %v397, %v396
        %v411 = vpack.c.b16 %v399, %v398
        %v412 = vpack.c.b16 %v401, %v400
        %v413 = vpack.c.b16 %v403, %v402
        %v414 = vpack.c.b16 %v405, %v404
        %v415 = vpack.c.b16 %v407, %v406
        %424 = vmatpush.bf16.msra.mxu0 %v415
        %425 = vmatpush.bf16.msra.mxu0 %v414
        %426 = vmatpush.bf16.msra.mxu0 %v413
        %427 = vmatpush.bf16.msra.mxu0 %v412
        %428 = vmatpush.bf16.msra.mxu0 %v411
        %429 = vmatpush.bf16.msra.mxu0 %v410
        %430 = vmatpush.bf16.msra.mxu0 %v409
        %431 = vmatpush.bf16.msra.mxu0 %v408
        %432 = vmatmul.bf16.gmra.mxu0 %v360
        %v433 = vpop.f32.mrf.mxu0
        %v434 = vadd.f32 0.0, %v433
        %v435 = vpop.f32.mrf.mxu0
        %v436 = vadd.f32 0.0, %v435
        %437 = vmatmul.bf16.gmra.mxu0 %v361
        %v438 = vpop.f32.mrf.mxu0
        %v439 = vadd.f32 0.0, %v438
        %v440 = vpop.f32.mrf.mxu0
        %v441 = vadd.f32 0.0, %v440
        %442 = vmatmul.bf16.gmra.mxu0 %v362
        %v443 = vpop.f32.mrf.mxu0
        %v444 = vadd.f32 0.0, %v443
        %v445 = vpop.f32.mrf.mxu0
        %v446 = vadd.f32 0.0, %v445
        %447 = vmatmul.bf16.gmra.mxu0 %v363
        %v448 = vpop.f32.mrf.mxu0
        %v449 = vadd.f32 0.0, %v448
        %v450 = vpop.f32.mrf.mxu0
        %v451 = vadd.f32 0.0, %v450
        %452 = vmatmul.bf16.gmra.mxu0 %v364
        %v453 = vpop.f32.mrf.mxu0
        %v454 = vadd.f32 0.0, %v453
        %v455 = vpop.f32.mrf.mxu0
        %v456 = vadd.f32 0.0, %v455
        %457 = vmatmul.bf16.gmra.mxu0 %v365
        %v458 = vpop.f32.mrf.mxu0
        %v459 = vadd.f32 0.0, %v458
        %v460 = vpop.f32.mrf.mxu0
        %v461 = vadd.f32 0.0, %v460
        %462 = vmatmul.bf16.gmra.mxu0 %v366
        %v463 = vpop.f32.mrf.mxu0
        %v464 = vadd.f32 0.0, %v463
        %v465 = vpop.f32.mrf.mxu0
        %v466 = vadd.f32 0.0, %v465
        %467 = vmatmul.bf16.gmra.mxu0 %v367
        %v468 = vpop.f32.mrf.mxu0
        %v469 = vadd.f32 0.0, %v468
        %v470 = vpop.f32.mrf.mxu0
        %v471 = vadd.f32 0.0, %v470
        %472 = vdwg.mxu0
        %v473 = vadd.f32 %v280, %v434
        %v474 = vadd.f32 %v281, %v436
        %v475 = vadd.f32 %v282, %v439
        %v476 = vadd.f32 %v283, %v441
        %v477 = vadd.f32 %v284, %v444
        %v478 = vadd.f32 %v285, %v446
        %v479 = vadd.f32 %v286, %v449
        %v480 = vadd.f32 %v287, %v451
        %v481 = vadd.f32 %v288, %v454
        %v482 = vadd.f32 %v289, %v456
        %v483 = vadd.f32 %v290, %v459
        %v484 = vadd.f32 %v291, %v461
        %v485 = vadd.f32 %v292, %v464
        %v486 = vadd.f32 %v293, %v466
        %v487 = vadd.f32 %v294, %v469
        %v488 = vadd.f32 %v295, %v471
        %489 = vst [vmem:[#allocation2] sm:$0xff] %v473
        %490 = vst [vmem:[#allocation2 + $0x8] sm:$0xff] %v474
        %491 = vst [vmem:[#allocation2 + $0x10] sm:$0xff] %v475
        %492 = vst [vmem:[#allocation2 + $0x18] sm:$0xff] %v476
        %493 = vst [vmem:[#allocation2 + $0x20] sm:$0xff] %v477
        %494 = vst [vmem:[#allocation2 + $0x28] sm:$0xff] %v478
        %495 = vst [vmem:[#allocation2 + $0x30] sm:$0xff] %v479
        %496 = vst [vmem:[#allocation2 + $0x38] sm:$0xff] %v480
        %497 = vst [vmem:[#allocation2 + $0x40] sm:$0xff] %v481
        %498 = vst [vmem:[#allocation2 + $0x48] sm:$0xff] %v482
        %499 = vst [vmem:[#allocation2 + $0x50] sm:$0xff] %v483
        %500 = vst [vmem:[#allocation2 + $0x58] sm:$0xff] %v484
        %501 = vst [vmem:[#allocation2 + $0x60] sm:$0xff] %v485
        %502 = vst [vmem:[#allocation2 + $0x68] sm:$0xff] %v486
        %503 = vst [vmem:[#allocation2 + $0x70] sm:$0xff] %v487
        %504 = vst [vmem:[#allocation2 + $0x78] sm:$0xff] %v488
        // Predicated region
        $region45: #{tpu_custom_call.1} parent=31 // pred_check
          %p505 = pneg %p260
        $region46: #{tpu_custom_call.1} parent=31 // pred_check_branch
          %507 = sbr.rel (%p505) target = $region48
        $region47: #{tpu_custom_call.1} parent=31 // pred_region
          %v508 = vld [vmem:[#allocation2] sm:$0xff]
          %v509 = vld [vmem:[#allocation2 + $0x8] sm:$0xff]
          %v510 = vld [vmem:[#allocation2 + $0x10] sm:$0xff]
          %v511 = vld [vmem:[#allocation2 + $0x18] sm:$0xff]
          %v512 = vld [vmem:[#allocation2 + $0x20] sm:$0xff]
          %v513 = vld [vmem:[#allocation2 + $0x28] sm:$0xff]
          %v514 = vld [vmem:[#allocation2 + $0x30] sm:$0xff]
          %v515 = vld [vmem:[#allocation2 + $0x38] sm:$0xff]
          %v516 = vld [vmem:[#allocation2 + $0x40] sm:$0xff]
          %v517 = vld [vmem:[#allocation2 + $0x48] sm:$0xff]
          %v518 = vld [vmem:[#allocation2 + $0x50] sm:$0xff]
          %v519 = vld [vmem:[#allocation2 + $0x58] sm:$0xff]
          %v520 = vld [vmem:[#allocation2 + $0x60] sm:$0xff]
          %v521 = vld [vmem:[#allocation2 + $0x68] sm:$0xff]
          %v522 = vld [vmem:[#allocation2 + $0x70] sm:$0xff]
          %v523 = vld [vmem:[#allocation2 + $0x78] sm:$0xff]
          %v524 = vld [vmem:[%s258] sm:$0x1]
          %v526 = vperm.slane %v524, 0
          %v528 = vadd.f32 %v508, %v526
          %v529 = vadd.f32 %v509, %v526
          %v530 = vadd.f32 %v510, %v526
          %v531 = vadd.f32 %v511, %v526
          %v532 = vadd.f32 %v512, %v526
          %v533 = vadd.f32 %v513, %v526
          %v534 = vadd.f32 %v514, %v526
          %v535 = vadd.f32 %v515, %v526
          %v536 = vadd.f32 %v516, %v526
          %v537 = vadd.f32 %v517, %v526
          %v538 = vadd.f32 %v518, %v526
          %v539 = vadd.f32 %v519, %v526
          %v540 = vadd.f32 %v520, %v526
          %v541 = vadd.f32 %v521, %v526
          %v542 = vadd.f32 %v522, %v526
          %v543 = vadd.f32 %v523, %v526
          %544 = vst [vmem:[%s253] sm:$0xff] %v528
          %545 = vst [vmem:[%s253 + $0x8] sm:$0xff] %v529
          %546 = vst [vmem:[%s253 + $0x10] sm:$0xff] %v530
          %547 = vst [vmem:[%s253 + $0x18] sm:$0xff] %v531
          %548 = vst [vmem:[%s253 + $0x20] sm:$0xff] %v532
          %549 = vst [vmem:[%s253 + $0x28] sm:$0xff] %v533
          %550 = vst [vmem:[%s253 + $0x30] sm:$0xff] %v534
          %551 = vst [vmem:[%s253 + $0x38] sm:$0xff] %v535
          %552 = vst [vmem:[%s253 + $0x40] sm:$0xff] %v536
          %553 = vst [vmem:[%s253 + $0x48] sm:$0xff] %v537
          %554 = vst [vmem:[%s253 + $0x50] sm:$0xff] %v538
          %555 = vst [vmem:[%s253 + $0x58] sm:$0xff] %v539
          %556 = vst [vmem:[%s253 + $0x60] sm:$0xff] %v540
          %557 = vst [vmem:[%s253 + $0x68] sm:$0xff] %v541
          %558 = vst [vmem:[%s253 + $0x70] sm:$0xff] %v542
          %559 = vst [vmem:[%s253 + $0x78] sm:$0xff] %v543
        $region48: #{tpu_custom_call.1} parent=31 // pred_fallthru
          _
        %s560 = sand.u32 %s132, 1
        %s561 = scalar_lea.sflag [#allocation5], %s560
        %s562 = sand.u32 %s132, 1
        %s563 = smul.addr %s562, 128
        %s564 = scalar_lea.vmem [#allocation8], %s563
        // Predicated region
        $region49: #{tpu_custom_call.1} parent=31 // pred_check
          %p565 = pneg %p142
        $region50: #{tpu_custom_call.1} parent=31 // pred_check_branch
          %567 = sbr.rel (%p565) target = $region52
        $region51: #{tpu_custom_call.1} parent=31 // pred_region
          %s568 = smul.u32 16, %s26
          %570 = vsyncadd %s561, 0
          %s571 = sadd.s32 %s27, %s568
          %s572 = smul.addr %s571, 8
          %s573 = scalar_lea.hbm %s3, %s572
          %s574 = sshll.u32 %s564, 4
          %s575 = int_to_ptr.vmem [resolvable:$true] %s574
          %s576 = sshll.u32 %s573, 4
          %s577 = int_to_ptr.hbm [resolvable:$true] %s576
          %582 = dma.vmem_to_hbm [thread:$0]  %s575, 2048, %s577, %s561, 128, 128, 8
        $region52: #{tpu_custom_call.1} parent=31 // pred_fallthru
          _
      $region32: #{tpu_custom_call.1} parent=5 // pred_fallthru
        _
      %p583 = scmp.le.s32.totalorder 2, %s16
      // Predicated region
      $region53: #{tpu_custom_call.1} parent=5 // pred_check
        %p584 = pneg %p583
      $region54: #{tpu_custom_call.1} parent=5 // pred_check_branch
        %586 = sbr.rel (%p584) target = $region56
      $region55: #{tpu_custom_call.1} parent=5 // pred_region
        %s587 = ssub.s32 %s16, 2
        // Predicated region
        $region57: #{tpu_custom_call.1} parent=55 // pred_check
          %p588 = pneg %p148
        $region58: #{tpu_custom_call.1} parent=55 // pred_check_branch
          %590 = sbr.rel (%p588) target = $region60
        $region59: #{tpu_custom_call.1} parent=55 // pred_region
          %s591 = sand.u32 %s133, 1
          %s592 = scalar_lea.sflag [#allocation5], %s591
          %s593 = sand.u32 %s133, 1
          %s594 = smul.addr %s593, 128
          %s595 = scalar_lea.vmem [#allocation8], %s594
          %597 = dma.done %s592, 2048
        $region60: #{tpu_custom_call.1} parent=55 // pred_fallthru
          _
      $region56: #{tpu_custom_call.1} parent=5 // pred_fallthru
        _
    $region6: #{tpu_custom_call.1} parent=1 // loop_footer
      %s20 = sadd.s32 1, %s16
    $region7: #{tpu_custom_call.1} parent=1 // loop_footer_branch
      %15 = sbr.rel target = $region3
    $region8: #{tpu_custom_call.1} parent=1 // loop_exit
      _
    %598 = vsyncpa [#allocation4], 1
    %s599 = scalar_lea.sflag [#allocation4], 1
    %600 = vsyncpa %s599, 1
    %601 = vsyncpa [#allocation7], 1
    %602 = vsyncpa [#allocation5], 1
    %s603 = scalar_lea.sflag [#allocation5], 1
    %604 = vsyncpa %s603, 1

</llo_original>
